<compile_context>
chip_gen: v5e
topology: v5e:2x2
jax: 0.10.0
libtpu: 0.0.40
codegen_flags: <defaults>
</compile_context>

<pallas_src>
import functools

import jax
import jax.numpy as jnp
from jax import lax
from jax.experimental import pallas as pl
from jax.experimental.pallas import tpu as pltpu

LOG_STD_MIN = -20.0
LOG_STD_MAX = 2.0


def _heads_kernel(x_ref, w_ref, b_ref, out_ref, *, n_t, n_p):
    """One fused matmul for both heads; masked clamp on the log_std lanes."""
    x = x_ref[...]                                            # (tb, n_in) f32
    out = jnp.dot(x, w_ref[...],
                  preferred_element_type=jnp.float32) + b_ref[...]

    # Column layout: [t_mean(n_t) | t_logstd(n_t) | p_mean(n_p) | p_logstd(n_p)]
    col = lax.broadcasted_iota(jnp.int32, out.shape, 1)
    is_logstd = ((col >= n_t) & (col < 2 * n_t)) | (col >= 2 * n_t + n_p)

    clamped = jnp.clip(out, LOG_STD_MIN, LOG_STD_MAX)
    out_ref[...] = jnp.where(is_logstd, clamped, out)


def torque_and_position_action(x, wt, bt, wp, bp):
    """Returns dict of distribution params for the 'torque' and 'position' heads.

    wt: (n_in, 2*n_out_torque), bt: (1, 2*n_out_torque)
    wp: (n_in, 2*n_out_position), bp: (1, 2*n_out_position)
    """
    B, n_in = x.shape
    n_t = wt.shape[1] // 2
    n_p = wp.shape[1] // 2
    n_total = 2 * (n_t + n_p)

    # Fuse both heads into one weight / bias (lane-dense output slab).
    w_cat = jnp.concatenate([wt, wp], axis=1)        # (n_in, n_total)
    b_cat = jnp.concatenate([bt, bp], axis=1)        # (1, n_total)

    # Batch tiling: 128-row blocks for large batches (fills sublanes / MXU
    # rows and enables double-buffered DMA); single full block for small B.
    if B % 128 == 0:
        block_b = 128
    else:
        block_b = B
    grid = (B // block_b,)

    kernel = functools.partial(_heads_kernel, n_t=n_t, n_p=n_p)

    out = pl.pallas_call(
        kernel,
        out_shape=jax.ShapeDtypeStruct((B, n_total), jnp.float32),
        grid=grid,
        in_specs=[
            pl.BlockSpec((block_b, n_in), lambda i: (i, 0)),     # x tile
            pl.BlockSpec((n_in, n_total), lambda i: (0, 0)),     # fused W (resident)
            pl.BlockSpec((1, n_total), lambda i: (0, 0)),        # fused bias (resident)
        ],
        out_specs=pl.BlockSpec((block_b, n_total), lambda i: (i, 0)),
        compiler_params=pltpu.CompilerParams(
            dimension_semantics=("parallel",)),
    )(x, w_cat, b_cat)

    # Static lane-dense slab split (handled by XLA, outside the kernel).
    t_mean = out[:, :n_t]
    t_logstd = out[:, n_t:2 * n_t]
    p_mean = out[:, 2 * n_t:2 * n_t + n_p]
    p_logstd = out[:, 2 * n_t + n_p:]

    return {
        "torque": {"mean": t_mean, "log_std": t_logstd},
        "position": {"mean": p_mean, "log_std": p_logstd},
    }


def _init_linear(key, n_in, n_out):
    """Deterministic PyTorch-style Linear init: U(-1/sqrt(n_in), 1/sqrt(n_in))."""
    kw, kb = jax.random.split(key)
    bound = 1.0 / jnp.sqrt(jnp.float32(n_in))
    w = jax.random.uniform(kw, (n_in, n_out), jnp.float32, -bound, bound)
    b = jax.random.uniform(kb, (1, n_out), jnp.float32, -bound, bound)
    return w, b


if __name__ == "__main__":
    # Small shapes consistent with the module: trifinger-style 9-dof torque and
    # 9-dof position actions from a 32-dim feature vector.
    B, n_in = 8, 32
    n_out_torque, n_out_position = 9, 9

    key = jax.random.PRNGKey(0)
    kx, kt, kp = jax.random.split(key, 3)

    x = jax.random.normal(kx, (B, n_in), jnp.float32)
    wt, bt = _init_linear(kt, n_in, 2 * n_out_torque)
    wp, bp = _init_linear(kp, n_in, 2 * n_out_position)

    out = torque_and_position_action(x, wt, bt, wp, bp)
    jax.block_until_ready(out)

    # Reference check in plain JAX.
    ref_t = x @ wt + bt
    ref_p = x @ wp + bp
    assert jnp.allclose(out["torque"]["mean"], ref_t[:, :n_out_torque],
                        atol=1e-5, rtol=1e-5)
    assert jnp.allclose(out["torque"]["log_std"],
                        jnp.clip(ref_t[:, n_out_torque:], LOG_STD_MIN, LOG_STD_MAX),
                        atol=1e-5, rtol=1e-5)
    assert jnp.allclose(out["position"]["mean"], ref_p[:, :n_out_position],
                        atol=1e-5, rtol=1e-5)
    assert jnp.allclose(out["position"]["log_std"],
                        jnp.clip(ref_p[:, n_out_position:], LOG_STD_MIN, LOG_STD_MAX),
                        atol=1e-5, rtol=1e-5)

    print("KERNEL_OK")
</pallas_src>

<mosaic_0001>
module attributes {stable_mosaic.version = 11 : i64} {
  func.func @_heads_kernel(%arg0: i32, %arg1: memref<8x32xf32, #tpu.memory_space<vmem>>, %arg2: memref<32x36xf32, #tpu.memory_space<vmem>>, %arg3: memref<1x36xf32, #tpu.memory_space<vmem>>, %arg4: memref<8x36xf32, #tpu.memory_space<vmem>>) attributes {dimension_semantics = [#tpu.dimension_semantics<parallel>], iteration_bounds = array<i64: 1>, scalar_prefetch = 0 : i64, scratch_operands = 0 : i64, tpu.core_type = #tpu.core_type<tc>, window_params = [{transform_indices = @transform_0, window_bounds = array<i64: 8, 32>}, {pipeline_mode = #tpu.pipeline_mode<synchronous>, transform_indices = @transform_1, window_bounds = array<i64: 32, 36>}, {pipeline_mode = #tpu.pipeline_mode<synchronous>, transform_indices = @transform_2, window_bounds = array<i64: 1, 36>}, {transform_indices = @transform_3, window_bounds = array<i64: 8, 36>}]} {
    %c0 = arith.constant 0 : index
    %c0_0 = arith.constant 0 : index
    %0 = vector.load %arg1[%c0, %c0_0] : memref<8x32xf32, #tpu.memory_space<vmem>>, vector<8x32xf32>
    %c0_1 = arith.constant 0 : index
    %c0_2 = arith.constant 0 : index
    %1 = vector.load %arg2[%c0_1, %c0_2] : memref<32x36xf32, #tpu.memory_space<vmem>>, vector<32x36xf32>
    %cst = arith.constant dense<0.000000e+00> : vector<8x36xf32>
    %2 = tpu.matmul %0, %1, %cst {dimension_numbers = #tpu.dot_dimension_numbers<[1], [0], [0], [1], [0, 0, 1, 1], [], []>} : vector<8x32xf32>, vector<32x36xf32>, vector<8x36xf32> -> vector<8x36xf32>
    %c0_3 = arith.constant 0 : index
    %c0_4 = arith.constant 0 : index
    %3 = vector.load %arg3[%c0_3, %c0_4] : memref<1x36xf32, #tpu.memory_space<vmem>>, vector<1x36xf32>
    %4 = vector.broadcast %3 : vector<1x36xf32> to vector<8x36xf32>
    %5 = arith.addf %2, %4 : vector<8x36xf32>
    %6 = tpu.iota {dimensions = array<i32: 1>} : vector<8x36xi32>
    %c9_i32 = arith.constant 9 : i32
    %7 = vector.broadcast %c9_i32 : i32 to vector<8x36xi32>
    %8 = arith.cmpi sge, %6, %7 : vector<8x36xi32>
    %c18_i32 = arith.constant 18 : i32
    %9 = vector.broadcast %c18_i32 : i32 to vector<8x36xi32>
    %10 = arith.cmpi slt, %6, %9 : vector<8x36xi32>
    %11 = arith.andi %8, %10 : vector<8x36xi1>
    %c27_i32 = arith.constant 27 : i32
    %12 = vector.broadcast %c27_i32 : i32 to vector<8x36xi32>
    %13 = arith.cmpi sge, %6, %12 : vector<8x36xi32>
    %14 = arith.ori %11, %13 : vector<8x36xi1>
    %cst_5 = arith.constant -2.000000e+01 : f32
    %cst_6 = arith.constant 2.000000e+00 : f32
    %15 = vector.broadcast %cst_5 : f32 to vector<8x36xf32>
    %16 = arith.maximumf %15, %5 : vector<8x36xf32>
    %17 = vector.broadcast %cst_6 : f32 to vector<8x36xf32>
    %18 = arith.minimumf %17, %16 : vector<8x36xf32>
    %19 = arith.select %14, %18, %5 : vector<8x36xi1>, vector<8x36xf32>
    %c0_7 = arith.constant 0 : index
    %c0_8 = arith.constant 0 : index
    %20 = vector.load %arg4[%c0_7, %c0_8] : memref<8x36xf32, #tpu.memory_space<vmem>>, vector<8x36xf32>
    tpu.vector_store %arg4[%c0_7, %c0_8], %19 {strides = array<i32>} : memref<8x36xf32, #tpu.memory_space<vmem>>, vector<8x36xf32>,
    return
  }
  func.func @transform_0(%arg0: i32) -> (i32, i32) {
    %c0_i32 = arith.constant 0 : i32
    %c0_i32_0 = arith.constant 0 : i32
    return %arg0, %c0_i32 : i32, i32
  }
  func.func @transform_1(%arg0: i32) -> (i32, i32) {
    %c0_i32 = arith.constant 0 : i32
    %c0_i32_0 = arith.constant 0 : i32
    %c0_i32_1 = arith.constant 0 : i32
    return %c0_i32, %c0_i32_0 : i32, i32
  }
  func.func @transform_2(%arg0: i32) -> (i32, i32) {
    %c0_i32 = arith.constant 0 : i32
    %c0_i32_0 = arith.constant 0 : i32
    %c0_i32_1 = arith.constant 0 : i32
    return %c0_i32, %c0_i32_0 : i32, i32
  }
  func.func @transform_3(%arg0: i32) -> (i32, i32) {
    %c0_i32 = arith.constant 0 : i32
    %c0_i32_0 = arith.constant 0 : i32
    return %arg0, %c0_i32 : i32, i32
  }
}

</mosaic_0001>

<llo_original>
// kernel: tpu_custom_call.1
$region0: #{tpu_custom_call.1}
  #allocation0 [shape = 'u32[]', space=smem, size = 0x4, offset = 0x4, fixed_abs, tag = 'smem constant byte address 0x4 - core index']
  #allocation1 [shape = 'u32[72,128]{1,0:T(1,128)}', space=vmem, size = 0x9000, scoped, tag = 'internal scratch']
  %s0 = inlined_call_operand.hbm [shape: f32[8,32], index: 0, kind: input, shape index: {}]
  %s1 = inlined_call_operand.hbm [shape: f32[32,36], index: 1, kind: input, shape index: {}]
  %s2 = inlined_call_operand.vmem [shape: f32[1,36], index: 2, kind: input, shape index: {}]
  %s3 = inlined_call_operand.hbm [shape: f32[8,36], index: 3, kind: output, shape index: {}]
  %s4 = sld [smem:[#allocation0]]
  $region30: #{tpu_custom_call.1} parent=0
    _
  %s6 = ssub.s32 1, %s4
  %s7 = scalar_select 0, %s6, %s4
  $region1: #{tpu_custom_call.1} parent=0
    #allocation2 [shape = 'u8[4096]{0}', space=vmem, size = 0x1000, scoped, tag = 'input window, operand 0, single buffered']
    #allocation3 [shape = 's32[1]{0}', space=sflag, size = 0x4, scoped, tag = 'scoped memory for tpu_custom_call.1']
    #allocation4 [shape = 's32[1]{0}', space=sflag, size = 0x4, scoped, tag = 'scoped memory for tpu_custom_call.1']
    #allocation5 [shape = 'u8[16384]{0}', space=vmem, size = 0x4000, scoped, tag = 'input window, operand 1, single buffered']
    #allocation6 [shape = 's32[1]{0}', space=sflag, size = 0x4, scoped, tag = 'scoped memory for tpu_custom_call.1']
    #allocation7 [shape = 'u8[4096]{0}', space=vmem, size = 0x1000, scoped, tag = 'output window, operand 0, single buffered']
    %8 = vsyncpa [#allocation3], 0
    %9 = vsyncpa [#allocation6], 0
    %10 = vsyncpa [#allocation4], 0
    // Predicated region
    $region2: #{tpu_custom_call.1} parent=1 // pred_check
      _
    $region3: #{tpu_custom_call.1} parent=1 // pred_check_branch
      %12 = sbr.rel (0) target = $region5
    $region4: #{tpu_custom_call.1} parent=1 // pred_region
      %14 = vsyncadd [#allocation3], 0
      %s16 = sshll.u32 %s0, 4
      %s17 = int_to_ptr.hbm [resolvable:$true] %s16
      %s18 = sshll.u32 [#allocation2], 4
      %s19 = int_to_ptr.vmem [resolvable:$true] %s18
      %21 = dma.hbm_to_vmem [thread:$0]  %s17, 128, %s19, [#allocation3]
    $region5: #{tpu_custom_call.1} parent=1 // pred_fallthru
      _
    // Predicated region
    $region6: #{tpu_custom_call.1} parent=1 // pred_check
      _
    $region7: #{tpu_custom_call.1} parent=1 // pred_check_branch
      %23 = sbr.rel (0) target = $region9
    $region8: #{tpu_custom_call.1} parent=1 // pred_region
      %25 = vsyncadd [#allocation6], 0
      %s26 = sshll.u32 %s1, 4
      %s27 = int_to_ptr.hbm [resolvable:$true] %s26
      %s28 = sshll.u32 [#allocation5], 4
      %s29 = int_to_ptr.vmem [resolvable:$true] %s28
      %34 = dma.hbm_to_vmem [thread:$0]  %s27, 512, %s29, [#allocation6], 128, 128, 8
    $region9: #{tpu_custom_call.1} parent=1 // pred_fallthru
      _
    // Predicated region
    $region10: #{tpu_custom_call.1} parent=1 // pred_check
      _
    $region11: #{tpu_custom_call.1} parent=1 // pred_check_branch
      %36 = sbr.rel (0) target = $region13
    $region12: #{tpu_custom_call.1} parent=1 // pred_region
      _
    $region13: #{tpu_custom_call.1} parent=1 // pred_fallthru
      _
    // Predicated region
    $region14: #{tpu_custom_call.1} parent=1 // pred_check
      _
    $region15: #{tpu_custom_call.1} parent=1 // pred_check_branch
      %38 = sbr.rel (0) target = $region17
    $region16: #{tpu_custom_call.1} parent=1 // pred_region
      %40 = dma.done [#allocation3], 128
    $region17: #{tpu_custom_call.1} parent=1 // pred_fallthru
      _
    // Predicated region
    $region18: #{tpu_custom_call.1} parent=1 // pred_check
      _
    $region19: #{tpu_custom_call.1} parent=1 // pred_check_branch
      %42 = sbr.rel (0) target = $region21
    $region20: #{tpu_custom_call.1} parent=1 // pred_region
      %44 = dma.done [#allocation6], 512
    $region21: #{tpu_custom_call.1} parent=1 // pred_fallthru
      _
    %v45 = vld [vmem:[#allocation2] sm:$0xff]
    %v46 = vld [vmem:[#allocation5] sm:$0xff]
    %v47 = vld [vmem:[#allocation5 + $0x8] sm:$0xff]
    %v48 = vld [vmem:[#allocation5 + $0x10] sm:$0xff]
    %v49 = vld [vmem:[#allocation5 + $0x18] sm:$0xff]
    %v50 = vld [vmem:[%s2] sm:$0x1]
    %v52 = vperm.slane %v50, 0
    %vm54 = vcmask 261120
    %v56 = vsel %vm54, %v45, 0
    %58 = vmatpush.msra.mxu0 0.0
    %59 = vmatpush.msra.mxu0 0.0
    %60 = vmatpush.msra.mxu0 0.0
    %61 = vmatpush.msra.mxu0 0.0
    %62 = vmatpush.msra.mxu0 0.0
    %63 = vmatpush.msra.mxu0 0.0
    %64 = vmatpush.msra.mxu0 0.0
    %65 = vmatpush.msra.mxu0 0.0
    %66 = vmatpush.msra.mxu0 0.0
    %67 = vmatpush.msra.mxu0 0.0
    %68 = vmatpush.msra.mxu0 0.0
    %69 = vmatpush.msra.mxu0 0.0
    %70 = vmatpush.msra.mxu0 %v49
    %71 = vmatpush.msra.mxu0 %v48
    %72 = vmatpush.msra.mxu0 %v47
    %73 = vmatpush.msra.mxu0 %v46
    %74 = vmatmul.f32.gmra.mxu0 %v56
    %v75 = vpop.f32.mrf.mxu0
    %v76 = vadd.f32 %v52, %v75
    %77 = vdwg.mxu0
    %v78 = vlaneseq
    %v79 = vand.u32 %v78, 127
    %vm80 = vcmp.ge.s32.totalorder %v79, 9
    %vm81 = vcmp.lt.s32.totalorder %v79, 18
    %vm82 = vmand %vm80, %vm81
    %vm83 = vcmp.ge.s32.totalorder %v79, 27
    %vm84 = vmor %vm82, %vm83
    %v85 = vmax.f32 %v76, -20.0
    %v86 = vmin.f32 %v85, 2.0
    %v87 = vsel %vm84, %v86, %v76
    %vm88 = vcmask 293888
    %89 = vst.msk [vmem:[#allocation7] sm:$0xff] %vm88, %v87
    // Predicated region
    $region22: #{tpu_custom_call.1} parent=1 // pred_check
      _
    $region23: #{tpu_custom_call.1} parent=1 // pred_check_branch
      %91 = sbr.rel (0) target = $region25
    $region24: #{tpu_custom_call.1} parent=1 // pred_region
      %93 = vsyncadd [#allocation4], 0
      %s95 = sshll.u32 [#allocation7], 4
      %s96 = int_to_ptr.vmem [resolvable:$true] %s95
      %s97 = sshll.u32 %s3, 4
      %s98 = int_to_ptr.hbm [resolvable:$true] %s97
      %100 = dma.vmem_to_hbm [thread:$0]  %s96, 128, %s98, [#allocation4]
    $region25: #{tpu_custom_call.1} parent=1 // pred_fallthru
      _
    // Predicated region
    $region26: #{tpu_custom_call.1} parent=1 // pred_check
      _
    $region27: #{tpu_custom_call.1} parent=1 // pred_check_branch
      %102 = sbr.rel (0) target = $region29
    $region28: #{tpu_custom_call.1} parent=1 // pred_region
      %104 = dma.done [#allocation4], 128
    $region29: #{tpu_custom_call.1} parent=1 // pred_fallthru
      _
    %105 = vsyncpa [#allocation3], 1
    %106 = vsyncpa [#allocation6], 1
    %107 = vsyncpa [#allocation4], 1

</llo_original>
